<compile_context>
chip_gen: v6e
topology: v6e:2x2x1
jax: 0.10.0
libtpu: 0.0.40
codegen_flags: <defaults>
</compile_context>

<pallas_src>
import functools

import numpy as np
import jax
import jax.numpy as jnp
from jax.experimental import pallas as pl
from jax.experimental.pallas import tpu as pltpu

_MIB = 1024 * 1024


# ----------------------------------------------------------------------------
# Hardware-aware sizing helpers
# ----------------------------------------------------------------------------
def _vmem_capacity_bytes():
    try:
        info = pltpu.get_tpu_info()
        cap = getattr(info, "vmem_capacity_bytes", None)
        if cap:
            return int(cap)
    except Exception:
        pass
    return 128 * _MIB


def _vmem_budgets():
    """(working budget for tile sizing, vmem_limit_bytes) per TPU generation."""
    cap = _vmem_capacity_bytes()
    if cap <= 64 * _MIB:            # v7x: 64 MiB VMEM per TensorCore
        return 12 * _MIB, 32 * _MIB
    return 32 * _MIB, 64 * _MIB     # v5e / v6e: 128 MiB VMEM


def _round_up(x, m):
    return ((x + m - 1) // m) * m


def _round_down(x, m):
    return (x // m) * m


def _row_align(dtype):
    # sub-32-bit dtypes pack rows along sublanes: align tiles to full packs
    return max(8, 32 // jnp.dtype(dtype).itemsize)


def _band_matrix(seq_len, kernel_size, stride, pad, l_out):
    """Wt[t, i] = (1/k) * #{ j in [0,k) : clip(t*stride + j - pad, 0, L-1) == i }.

    Encodes replicate padding (clamped source index), the mean (1/k) and the
    stride in a single (l_out, L) band matrix built from static shapes.
    """
    t = np.arange(l_out)[:, None] * stride
    j = np.arange(kernel_size)[None, :]
    src = np.clip(t + j - pad, 0, seq_len - 1)                  # (l_out, k)
    w = np.zeros((l_out, seq_len), np.float32)
    np.add.at(
        w,
        (np.repeat(np.arange(l_out), kernel_size), src.ravel()),
        np.float32(1.0 / kernel_size),
    )
    return w                                                    # (l_out, L)


# ----------------------------------------------------------------------------
# Kernels
# ----------------------------------------------------------------------------
def _rows_matmul_kernel(w_ref, x_ref, o_ref):
    # x: (tile_r, L) rows = flattened (batch, channel), time on lanes
    # w: (L, l_out) VMEM-resident band matrix (padding + mean + stride baked in)
    x = x_ref[...].astype(jnp.float32)
    o_ref[...] = jnp.dot(
        x, w_ref[...], preferred_element_type=jnp.float32
    ).astype(o_ref.dtype)


def _channels_matmul_kernel(w_ref, x_ref, o_ref):
    # x: (1, L, tile_c) -- time on sublanes, channels on lanes (no transposes)
    # w: (l_out, L) VMEM-resident band matrix
    x = x_ref[0].astype(jnp.float32)                            # (L, tile_c)
    o_ref[0] = jnp.dot(
        w_ref[...], x, preferred_element_type=jnp.float32
    ).astype(o_ref.dtype)


def _rows_taps_kernel(x_ref, o_ref, *, kernel_size, pad):
    """Fallback for sequences too long for a VMEM-resident band matrix.

    Dense (stride-1) moving average along the lane (time) axis via an unrolled
    tap loop.  Accumulator starts from the first tap (no zeros pass).
    """
    x = x_ref[...].astype(jnp.float32)
    rows, seq_len = x.shape
    l_dense = o_ref.shape[1]

    if pad > 0:
        first = jnp.broadcast_to(x[:, 0:1], (rows, pad))
        last = jnp.broadcast_to(x[:, seq_len - 1:seq_len], (rows, pad))
        xp = jnp.concatenate([first, x, last], axis=1)
    else:
        xp = x

    acc = xp[:, 0:l_dense]
    for j in range(1, kernel_size):
        acc = acc + xp[:, j:j + l_dense]
    # TODO(synk): for very long sequences a cumsum-difference pass would make
    # this O(1) taps per output and avoid the in-VMEM padded copy.
    o_ref[...] = (acc * (1.0 / kernel_size)).astype(o_ref.dtype)


# ----------------------------------------------------------------------------
# pallas_call wrappers for the three layouts
# ----------------------------------------------------------------------------
def _run_rows_matmul(xr, w, budget, vmem_limit):
    rows, seq_len = xr.shape
    l_out = w.shape[1]
    itemsize = jnp.dtype(xr.dtype).itemsize
    w_bytes = int(w.size) * 4
    align = _row_align(xr.dtype)

    per_row = 2 * (seq_len + l_out) * itemsize + 4 * (seq_len + l_out)
    tile_r = (budget - 2 * w_bytes) // max(per_row, 1)
    tile_r = _round_down(min(int(tile_r), 2048), align)
    tile_r = max(tile_r, align)
    if tile_r >= rows:
        # guarantee >=2 grid programs (megacore on v7x, DMA pipelining) if possible
        half = _round_up(pl.cdiv(rows, 2), align)
        tile_r = half if half < rows else rows
    grid = (pl.cdiv(rows, tile_r),)

    cost = pl.CostEstimate(
        flops=int(2 * rows * seq_len * l_out),
        transcendentals=0,
        bytes_accessed=int(rows * (seq_len + l_out) * itemsize + w_bytes),
    )

    return pl.pallas_call(
        _rows_matmul_kernel,
        out_shape=jax.ShapeDtypeStruct((rows, l_out), xr.dtype),
        grid_spec=pltpu.PrefetchScalarGridSpec(
            num_scalar_prefetch=0,
            grid=grid,
            in_specs=[
                pl.BlockSpec((seq_len, l_out), lambda i: (0, 0)),   # W stays in VMEM
                pl.BlockSpec((tile_r, seq_len), lambda i: (i, 0)),
            ],
            out_specs=pl.BlockSpec((tile_r, l_out), lambda i: (i, 0)),
        ),
        compiler_params=pltpu.CompilerParams(
            dimension_semantics=("parallel",),
            vmem_limit_bytes=vmem_limit,
        ),
        cost_estimate=cost,
    )(w, xr)


def _run_channels_matmul(x3, wt, budget, vmem_limit):
    b, seq_len, c = x3.shape
    l_out = wt.shape[0]
    itemsize = jnp.dtype(x3.dtype).itemsize
    w_bytes = int(wt.size) * 4

    per_col = 2 * (seq_len + l_out) * itemsize + 4 * (seq_len + l_out)
    tile_c = (budget - 2 * w_bytes) // max(per_col, 1)
    tile_c = _round_down(min(int(tile_c), 4096), 128)
    tile_c = max(tile_c, 128)
    if tile_c >= c:
        if b == 1 and c >= 256:
            # split channels so both TensorCores (v7x) get a program
            tile_c = _round_up(pl.cdiv(c, 2), 128)
        if tile_c >= c:
            tile_c = c
    n_ct = pl.cdiv(c, tile_c)

    cost = pl.CostEstimate(
        flops=int(2 * b * c * seq_len * l_out),
        transcendentals=0,
        bytes_accessed=int(b * c * (seq_len + l_out) * itemsize + w_bytes),
    )

    return pl.pallas_call(
        _channels_matmul_kernel,
        out_shape=jax.ShapeDtypeStruct((b, l_out, c), x3.dtype),
        grid_spec=pltpu.PrefetchScalarGridSpec(
            num_scalar_prefetch=0,
            grid=(b, n_ct),
            in_specs=[
                pl.BlockSpec((l_out, seq_len), lambda i, j: (0, 0)),  # W stays in VMEM
                pl.BlockSpec((1, seq_len, tile_c), lambda i, j: (i, 0, j)),
            ],
            out_specs=pl.BlockSpec((1, l_out, tile_c), lambda i, j: (i, 0, j)),
        ),
        compiler_params=pltpu.CompilerParams(
            dimension_semantics=("parallel", "parallel"),
            vmem_limit_bytes=vmem_limit,
        ),
        cost_estimate=cost,
    )(wt, x3)


def _run_rows_taps(xr, kernel_size, stride, pad, budget, vmem_limit):
    rows, seq_len = xr.shape
    l_pad = seq_len + 2 * pad
    l_dense = l_pad - kernel_size + 1
    itemsize = jnp.dtype(xr.dtype).itemsize
    align = _row_align(xr.dtype)

    per_row = 2 * (seq_len + l_dense) * itemsize + 4 * (l_pad + l_dense)
    tile_r = budget // max(per_row, 1)
    tile_r = _round_down(min(int(tile_r), 1024), align)
    tile_r = max(tile_r, align)
    if tile_r >= rows:
        half = _round_up(pl.cdiv(rows, 2), align)
        tile_r = half if half < rows else rows
    grid = (pl.cdiv(rows, tile_r),)

    kernel = functools.partial(_rows_taps_kernel, kernel_size=kernel_size, pad=pad)
    cost = pl.CostEstimate(
        flops=int(rows * l_dense * (kernel_size + 1)),
        transcendentals=0,
        bytes_accessed=int(rows * (seq_len + l_dense) * itemsize),
    )

    dense = pl.pallas_call(
        kernel,
        out_shape=jax.ShapeDtypeStruct((rows, l_dense), xr.dtype),
        grid_spec=pltpu.PrefetchScalarGridSpec(
            num_scalar_prefetch=0,
            grid=grid,
            in_specs=[pl.BlockSpec((tile_r, seq_len), lambda i: (i, 0))],
            out_specs=pl.BlockSpec((tile_r, l_dense), lambda i: (i, 0)),
        ),
        compiler_params=pltpu.CompilerParams(
            dimension_semantics=("parallel",),
            vmem_limit_bytes=vmem_limit,
        ),
        cost_estimate=cost,
    )(xr)

    if stride != 1:
        # TODO(synk): emit only the strided columns inside the fallback kernel;
        # the main (band-matmul) path already does so via W.
        dense = dense[:, ::stride]
    return dense


# ----------------------------------------------------------------------------
# Public entry point (matches the PyTorch moving_avg.forward semantics)
# ----------------------------------------------------------------------------
def moving_avg(x, kernel_size, stride, *, _max_w_bytes=8 * _MIB):
    """AvgPool1d over time with replicate padding of (kernel_size-1)//2.

    x: [B, L, C] (3D) or [L, C] (2D). Returns the same rank. For even
    kernel_size the output is one step shorter, matching the PyTorch module.
    """
    if x.ndim == 3:
        b, seq_len, c = x.shape
    elif x.ndim == 2:
        seq_len, c = x.shape
        b = 1
    else:
        raise Exception(
            "Unsupported data shape: {}, [seq_len, bsz, patch_len] or "
            "[series_len, n_vars]".format(x.shape)
        )

    pad = (kernel_size - 1) // 2
    l_pad = seq_len + 2 * pad
    if l_pad < kernel_size:
        raise Exception("kernel_size too large for sequence length")
    l_out = (l_pad - kernel_size) // stride + 1

    budget, vmem_limit = _vmem_budgets()
    w_limit = min(_max_w_bytes, budget // 3)
    w_bytes = seq_len * l_out * 4
    use_matmul = w_bytes <= w_limit

    if use_matmul:
        wt_np = _band_matrix(seq_len, kernel_size, stride, pad, l_out)  # (l_out, L)

        if c >= 128:
            # Keep [B, L, C]: channels on lanes, stencil via W @ x on the MXU.
            x3 = x if x.ndim == 3 else x[None]
            out3 = _run_channels_matmul(x3, jnp.asarray(wt_np), budget, vmem_limit)
            return out3 if x.ndim == 3 else out3[0]

        # Small C: flatten (batch, channel) into rows, time on lanes.
        if x.ndim == 3:
            xr = jnp.transpose(x, (0, 2, 1)).reshape(b * c, seq_len)
        else:
            xr = jnp.transpose(x, (1, 0))
        out_r = _run_rows_matmul(xr, jnp.asarray(wt_np.T), budget, vmem_limit)
    else:
        # TODO(synk): large-C + very-long-L could keep the [B,L,C] layout with a
        # halo'd sublane stencil; for now fall back to the row tap-loop path.
        if x.ndim == 3:
            xr = jnp.transpose(x, (0, 2, 1)).reshape(b * c, seq_len)
        else:
            xr = jnp.transpose(x, (1, 0))
        out_r = _run_rows_taps(xr, kernel_size, stride, pad, budget, vmem_limit)

    if x.ndim == 3:
        return jnp.transpose(out_r.reshape(b, c, l_out), (0, 2, 1))
    return jnp.transpose(out_r, (1, 0))


# ----------------------------------------------------------------------------
# Pure-JAX reference mirroring the PyTorch semantics
# ----------------------------------------------------------------------------
def _reference_moving_avg(x, kernel_size, stride):
    squeeze = x.ndim == 2
    if squeeze:
        x = x[None]
    pad = (kernel_size - 1) // 2
    front = jnp.repeat(x[:, 0:1, :], pad, axis=1)
    end = jnp.repeat(x[:, -1:, :], pad, axis=1)
    xp = jnp.concatenate([front, x, end], axis=1)
    l_pad = xp.shape[1]
    l_out = (l_pad - kernel_size) // stride + 1
    windows = jnp.stack(
        [xp[:, t * stride:t * stride + kernel_size, :] for t in range(l_out)],
        axis=1,
    )  # [B, L_out, K, C]
    out = jnp.mean(windows.astype(jnp.float32), axis=2).astype(x.dtype)
    if squeeze:
        out = out[0]
    return out


if __name__ == "__main__":
    key = jax.random.PRNGKey(0)
    k1, k2, k3, k4 = jax.random.split(key, 4)

    def _check(y, ref, atol=1e-5, rtol=1e-5):
        assert y.shape == ref.shape, (y.shape, ref.shape)
        assert jnp.allclose(y, ref, atol=atol, rtol=rtol)

    # 1) 3D, small C, rows not divisible by the row tile (partial block path).
    x3a = jax.random.normal(k1, (3, 16, 4), dtype=jnp.float32)
    _check(jax.block_until_ready(moving_avg(x3a, 5, 1)),
           _reference_moving_avg(x3a, 5, 1))

    # 2) 2D input [series_len, n_vars].
    x2 = jax.random.normal(k2, (16, 8), dtype=jnp.float32)
    _check(jax.block_until_ready(moving_avg(x2, 5, 1)),
           _reference_moving_avg(x2, 5, 1))

    # 3) Large-C channel-lane path (no transposes), odd k, stride 2.
    x3c = jax.random.normal(k3, (2, 16, 256), dtype=jnp.float32)
    _check(jax.block_until_ready(moving_avg(x3c, 7, 2)),
           _reference_moving_avg(x3c, 7, 2))

    # 3b) Large-C, 2D, B==1 -> channel axis split to keep >=2 grid programs.
    x2c = jax.random.normal(k3, (16, 256), dtype=jnp.float32)
    _check(jax.block_until_ready(moving_avg(x2c, 7, 1)),
           _reference_moving_avg(x2c, 7, 1))

    # 4) Even kernel_size + stride > 1 on the band-matmul path.
    x3b = jax.random.normal(k4, (2, 16, 8), dtype=jnp.float32)
    _check(jax.block_until_ready(moving_avg(x3b, 4, 2)),
           _reference_moving_avg(x3b, 4, 2))

    # 5) Force the tap-loop fallback (W treated as too large for VMEM).
    _check(jax.block_until_ready(moving_avg(x3b, 5, 2, _max_w_bytes=0)),
           _reference_moving_avg(x3b, 5, 2))

    # 6) bf16 input (exercises dtype-aware row alignment and f32 accumulation).
    x3bf = jax.random.normal(k1, (2, 16, 8), dtype=jnp.bfloat16)
    _check(jax.block_until_ready(moving_avg(x3bf, 5, 1)),
           _reference_moving_avg(x3bf, 5, 1), atol=2e-2, rtol=2e-2)

    print("KERNEL_OK")
</pallas_src>

<mosaic_0001>
module attributes {stable_mosaic.version = 11 : i64} {
  func.func @_rows_matmul_kernel(%arg0: i32, %arg1: memref<16x16xf32, #tpu.memory_space<vmem>>, %arg2: memref<8x16xf32, #tpu.memory_space<vmem>>, %arg3: memref<8x16xf32, #tpu.memory_space<vmem>>) attributes {dimension_semantics = [#tpu.dimension_semantics<parallel>], iteration_bounds = array<i64: 2>, scalar_prefetch = 0 : i64, scratch_operands = 0 : i64, tpu.core_type = #tpu.core_type<tc>, window_params = [{pipeline_mode = #tpu.pipeline_mode<synchronous>, transform_indices = @transform_0, window_bounds = array<i64: 16, 16>}, {transform_indices = @transform_1, window_bounds = array<i64: 8, 16>}, {transform_indices = @transform_2, window_bounds = array<i64: 8, 16>}]} {
    %c0 = arith.constant 0 : index
    %c0_0 = arith.constant 0 : index
    %0 = vector.load %arg2[%c0, %c0_0] : memref<8x16xf32, #tpu.memory_space<vmem>>, vector<8x16xf32>
    %c0_1 = arith.constant 0 : index
    %c0_2 = arith.constant 0 : index
    %1 = vector.load %arg1[%c0_1, %c0_2] : memref<16x16xf32, #tpu.memory_space<vmem>>, vector<16x16xf32>
    %cst = arith.constant dense<0.000000e+00> : vector<8x16xf32>
    %2 = tpu.matmul %0, %1, %cst {dimension_numbers = #tpu.dot_dimension_numbers<[1], [0], [0], [1], [0, 0, 1, 1], [], []>} : vector<8x16xf32>, vector<16x16xf32>, vector<8x16xf32> -> vector<8x16xf32>
    %c0_3 = arith.constant 0 : index
    %c0_4 = arith.constant 0 : index
    %3 = vector.load %arg3[%c0_3, %c0_4] : memref<8x16xf32, #tpu.memory_space<vmem>>, vector<8x16xf32>
    tpu.vector_store %arg3[%c0_3, %c0_4], %2 {strides = array<i32>} : memref<8x16xf32, #tpu.memory_space<vmem>>, vector<8x16xf32>,
    return
  }
  func.func @transform_0(%arg0: i32) -> (i32, i32) {
    %c0_i32 = arith.constant 0 : i32
    %c0_i32_0 = arith.constant 0 : i32
    %c0_i32_1 = arith.constant 0 : i32
    return %c0_i32, %c0_i32_0 : i32, i32
  }
  func.func @transform_1(%arg0: i32) -> (i32, i32) {
    %c0_i32 = arith.constant 0 : i32
    %c0_i32_0 = arith.constant 0 : i32
    return %arg0, %c0_i32 : i32, i32
  }
  func.func @transform_2(%arg0: i32) -> (i32, i32) {
    %c0_i32 = arith.constant 0 : i32
    %c0_i32_0 = arith.constant 0 : i32
    return %arg0, %c0_i32 : i32, i32
  }
}

</mosaic_0001>

<llo_original>
// kernel: tpu_custom_call.1
$region0: #{tpu_custom_call.1}
  #allocation0 [shape = 'u32[]', space=smem, size = 0x4, offset = 0x4, fixed_abs, tag = 'smem constant byte address 0x4 - core index']
  #allocation1 [shape = 'u32[144,128]{1,0:T(1,128)}', space=vmem, size = 0x12000, scoped, tag = 'internal scratch']
  %s0 = inlined_call_operand.hbm [shape: f32[16,16], index: 0, kind: input, shape index: {}]
  %s1 = inlined_call_operand.hbm [shape: f32[12,16], index: 1, kind: input, shape index: {}]
  %s2 = inlined_call_operand.hbm [shape: f32[12,16], index: 2, kind: output, shape index: {}]
  %s3 = sld [smem:[#allocation0]]
  $region49: #{tpu_custom_call.1} parent=0
    _
  %s5 = ssub.s32 1, %s3
  %s6 = scalar_select 0, %s5, %s3
  $region1: #{tpu_custom_call.1} parent=0
    #allocation2 [shape = 'u8[8192]{0}', space=vmem, size = 0x2000, scoped, tag = 'input window, operand 0, single buffered']
    #allocation3 [shape = 's32[2]{0}', space=sflag, size = 0x8, scoped, tag = 'scoped memory for tpu_custom_call.1']
    #allocation4 [shape = 's32[2]{0}', space=sflag, size = 0x8, scoped, tag = 'scoped memory for tpu_custom_call.1']
    #allocation5 [shape = 'u8[8192]{0}', space=vmem, size = 0x2000, scoped, tag = 'input window, operand 1']
    #allocation6 [shape = 's32[2]{0}', space=sflag, size = 0x8, scoped, tag = 'scoped memory for tpu_custom_call.1']
    #allocation7 [shape = 'u8[8192]{0}', space=vmem, size = 0x2000, scoped, tag = 'output window, operand 0']
    %7 = vsyncpa [#allocation3], 0
    %8 = vsyncpa [#allocation6], 0
    %s9 = scalar_lea.sflag [#allocation6], 1
    %10 = vsyncpa %s9, 0
    %11 = vsyncpa [#allocation4], 0
    %s12 = scalar_lea.sflag [#allocation4], 1
    %13 = vsyncpa %s12, 0
    loop: start=0, step=1, limit=4
    $region2: #{tpu_custom_call.1} parent=1 // loop_pre_header
      _
    $region3: #{tpu_custom_call.1} parent=1 // loop_header
      %s15 = sphi 0, %s19
      %p16 = scmp.ge.s32.totalorder %s15, 4
      %s23 = sphi 0, %s23
      %s25 = sphi 0, %s23
      %s26 = sphi 0, %s25
      %s40 = sphi 0, %s26
      %s46 = sphi 0, %s48
      %s49 = sphi 0, %s46
      %s50 = sphi 0, %s49
      %s66 = sphi 0, %s50
      %s72 = sphi 0, %s74
      %s75 = sphi 0, %s72
      %s76 = sphi 0, %s75
      %s92 = sphi 0, %s76
    $region4: #{tpu_custom_call.1} parent=1 // loop_header_branch
      %18 = sbr.rel (%p16) target = $region8
    $region5: #{tpu_custom_call.1} parent=1 // loop_body
      %s20 = ssub.s32 %s15, 1
      %s21 = ssub.s32 %s15, 2
      %s22 = sadd.s32 %s15, 1
      %s24 = sadd.s32 %s23, 1
      %p27 = scmp.eq.s32.totalorder %s15, 1
      %p28 = scmp.ne.s32.totalorder %s23, %s25
      %p29 = scmp.eq.s32.totalorder %s15, 0
      %p30 = por %p28, %p29
      %p31 = scmp.ne.s32.totalorder %s23, %s25
      %p32 = scmp.eq.s32.totalorder %s20, 1
      %p33 = por %p31, %p32
      %p34 = scmp.ne.s32.totalorder %s25, %s26
      %p35 = scmp.eq.s32.totalorder %s20, 0
      %p36 = por %p34, %p35
      %p37 = scmp.ne.s32.totalorder %s25, %s26
      %p38 = scmp.eq.s32.totalorder %s21, 1
      %p39 = por %p37, %p38
      %p41 = scmp.ne.s32.totalorder %s26, %s40
      %p42 = scmp.eq.s32.totalorder %s21, 0
      %p43 = por %p41, %p42
      %s44 = ssub.s32 %s15, %s22
      %p45 = scmp.eq.s32.totalorder %s44, 0
      %s47 = sadd.s32 %s46, 1
      %s48 = scalar_select %p45, %s46, %s47
      %p51 = pneg %p45
      %p52 = scmp.eq.s32.totalorder %s15, 1
      %p53 = por %p51, %p52
      %p54 = scmp.ne.s32.totalorder %s46, %s49
      %p55 = scmp.eq.s32.totalorder %s15, 0
      %p56 = por %p54, %p55
      %p57 = scmp.ne.s32.totalorder %s46, %s49
      %p58 = scmp.eq.s32.totalorder %s20, 1
      %p59 = por %p57, %p58
      %p60 = scmp.ne.s32.totalorder %s49, %s50
      %p61 = scmp.eq.s32.totalorder %s20, 0
      %p62 = por %p60, %p61
      %p63 = scmp.ne.s32.totalorder %s49, %s50
      %p64 = scmp.eq.s32.totalorder %s21, 1
      %p65 = por %p63, %p64
      %p67 = scmp.ne.s32.totalorder %s50, %s66
      %p68 = scmp.eq.s32.totalorder %s21, 0
      %p69 = por %p67, %p68
      %s70 = ssub.s32 %s15, %s22
      %p71 = scmp.eq.s32.totalorder %s70, 0
      %s73 = sadd.s32 %s72, 1
      %s74 = scalar_select %p71, %s72, %s73
      %p77 = pneg %p71
      %p78 = scmp.eq.s32.totalorder %s15, 1
      %p79 = por %p77, %p78
      %p80 = scmp.ne.s32.totalorder %s72, %s75
      %p81 = scmp.eq.s32.totalorder %s15, 0
      %p82 = por %p80, %p81
      %p83 = scmp.ne.s32.totalorder %s72, %s75
      %p84 = scmp.eq.s32.totalorder %s20, 1
      %p85 = por %p83, %p84
      %p86 = scmp.ne.s32.totalorder %s75, %s76
      %p87 = scmp.eq.s32.totalorder %s20, 0
      %p88 = por %p86, %p87
      %p89 = scmp.ne.s32.totalorder %s75, %s76
      %p90 = scmp.eq.s32.totalorder %s21, 1
      %p91 = por %p89, %p90
      %p93 = scmp.ne.s32.totalorder %s76, %s92
      %p94 = scmp.eq.s32.totalorder %s21, 0
      %p95 = por %p93, %p94
      %p96 = scmp.le.s32.totalorder 1, %s15
      %p97 = scmp.lt.s32.totalorder %s15, 3
      %p98 = pnand %p96, %p97
      %p99 = pneg %p98
      // Predicated region
      $region9: #{tpu_custom_call.1} parent=5 // pred_check
        _
      $region10: #{tpu_custom_call.1} parent=5 // pred_check_branch
        %101 = sbr.rel (%p98) target = $region12
      $region11: #{tpu_custom_call.1} parent=5 // pred_region
        %s102 = ssub.s32 %s15, 1
        // Predicated region
        $region13: #{tpu_custom_call.1} parent=11 // pred_check
          %p103 = pneg %p36
        $region14: #{tpu_custom_call.1} parent=11 // pred_check_branch
          %105 = sbr.rel (%p103) target = $region16
        $region15: #{tpu_custom_call.1} parent=11 // pred_region
          %s107 = ssub.s32 256, 256
          %108 = vsyncadd [#allocation3], %s107
          %s109 = sshll.u32 [#allocation2], 4
          %s110 = int_to_ptr.vmem [resolvable:$true] %s109
          %115 = dma.hbm_to_vmem [thread:$0]  %s0, 256, %s110, [#allocation3], 128, 128, 8
        $region16: #{tpu_custom_call.1} parent=11 // pred_fallthru
          _
      $region12: #{tpu_custom_call.1} parent=5 // pred_fallthru
        _
      %p116 = scmp.lt.s32.totalorder %s15, 2
      // Predicated region
      $region17: #{tpu_custom_call.1} parent=5 // pred_check
        %p117 = pneg %p116
      $region18: #{tpu_custom_call.1} parent=5 // pred_check_branch
        %119 = sbr.rel (%p117) target = $region20
      $region19: #{tpu_custom_call.1} parent=5 // pred_region
        // Predicated region
        $region21: #{tpu_custom_call.1} parent=19 // pred_check
          %p120 = pneg %p56
        $region22: #{tpu_custom_call.1} parent=19 // pred_check_branch
          %122 = sbr.rel (%p120) target = $region24
        $region23: #{tpu_custom_call.1} parent=19 // pred_region
          %s123 = sand.u32 %s46, 1
          %s124 = scalar_lea.sflag [#allocation6], %s123
          %s125 = sand.u32 %s46, 1
          %s126 = smul.addr %s125, 8
          %s127 = scalar_lea.vmem [#allocation5], %s126
          %s129 = ssub.s32 128, 128
          %130 = vsyncadd %s124, %s129
          %s131 = smul.addr %s15, 128
          %s132 = scalar_lea.hbm %s1, %s131
          %s134 = sshll.u32 %s127, 4
          %s135 = int_to_ptr.vmem [resolvable:$true] %s134
          %137 = dma.hbm_to_vmem [thread:$0]  %s132, 128, %s135, %s124
        $region24: #{tpu_custom_call.1} parent=19 // pred_fallthru
          _
      $region20: #{tpu_custom_call.1} parent=5 // pred_fallthru
        _
      %p138 = scmp.le.s32.totalorder 1, %s15
      %p139 = scmp.lt.s32.totalorder %s15, 3
      %p140 = pnand %p138, %p139
      %p141 = pneg %p140
      // Predicated region
      $region25: #{tpu_custom_call.1} parent=5 // pred_check
        _
      $region26: #{tpu_custom_call.1} parent=5 // pred_check_branch
        %143 = sbr.rel (%p140) target = $region28
      $region27: #{tpu_custom_call.1} parent=5 // pred_region
        %s144 = ssub.s32 %s15, 1
        // Predicated region
        $region29: #{tpu_custom_call.1} parent=27 // pred_check
          %p145 = pneg %p36
        $region30: #{tpu_custom_call.1} parent=27 // pred_check_branch
          %147 = sbr.rel (%p145) target = $region32
        $region31: #{tpu_custom_call.1} parent=27 // pred_region
          %148 = dma.done [#allocation3], 256
        $region32: #{tpu_custom_call.1} parent=27 // pred_fallthru
          _
        %s149 = sand.u32 %s49, 1
        %s150 = scalar_lea.sflag [#allocation6], %s149
        %s151 = sand.u32 %s49, 1
        %s152 = smul.addr %s151, 8
        %s153 = scalar_lea.vmem [#allocation5], %s152
        // Predicated region
        $region33: #{tpu_custom_call.1} parent=27 // pred_check
          %p154 = pneg %p62
        $region34: #{tpu_custom_call.1} parent=27 // pred_check_branch
          %156 = sbr.rel (%p154) target = $region36
        $region35: #{tpu_custom_call.1} parent=27 // pred_region
          %157 = dma.done %s150, 128
        $region36: #{tpu_custom_call.1} parent=27 // pred_fallthru
          _
        %p158 = pneg %p36
        %p159 = pneg %p33
        %s160 = sand.u32 %s49, 1
        %s161 = scalar_lea.sflag [#allocation6], %s160
        %s162 = sand.u32 %s49, 1
        %s163 = smul.addr %s162, 8
        %s164 = scalar_lea.vmem [#allocation5], %s163
        %p165 = pneg %p62
        %p166 = pneg %p59
        %p167 = pneg %p88
        %p168 = pneg %p85
        %s169 = sand.u32 %s75, 1
        %s170 = scalar_lea.sflag [#allocation4], %s169
        %s171 = sand.u32 %s75, 1
        %s172 = smul.addr %s171, 8
        %s173 = scalar_lea.vmem [#allocation7], %s172
        %v174 = vld [vmem:[%s153] sm:$0xff]
        %v175 = vld [vmem:[#allocation2] sm:$0xff]
        %v176 = vld [vmem:[#allocation2 + $0x8] sm:$0xff]
        %vm177 = vcmask 130048
        %v179 = vsel %vm177, %v174, 0
        %181 = vmatprep.subr.mxu0 0.0
        %182 = vmatpush1.msra.mxu0 0.0
        %183 = vmatprep.subr.mxu0 0.0
        %184 = vmatpush1.msra.mxu0 0.0
        %185 = vmatprep.subr.mxu0 0.0
        %186 = vmatpush1.msra.mxu0 0.0
        %187 = vmatprep.subr.mxu0 0.0
        %188 = vmatpush1.msra.mxu0 0.0
        %189 = vmatprep.subr.mxu0 0.0
        %190 = vmatpush1.msra.mxu0 0.0
        %191 = vmatprep.subr.mxu0 0.0
        %192 = vmatpush1.msra.mxu0 0.0
        %193 = vmatprep.subr.mxu0 0.0
        %194 = vmatpush1.msra.mxu0 0.0
        %195 = vmatprep.subr.mxu0 0.0
        %196 = vmatpush1.msra.mxu0 0.0
        %197 = vmatprep.subr.mxu0 0.0
        %198 = vmatpush1.msra.mxu0 0.0
        %199 = vmatprep.subr.mxu0 0.0
        %200 = vmatpush1.msra.mxu0 0.0
        %201 = vmatprep.subr.mxu0 0.0
        %202 = vmatpush1.msra.mxu0 0.0
        %203 = vmatprep.subr.mxu0 0.0
        %204 = vmatpush1.msra.mxu0 0.0
        %205 = vmatprep.subr.mxu0 0.0
        %206 = vmatpush1.msra.mxu0 0.0
        %207 = vmatprep.subr.mxu0 0.0
        %208 = vmatpush1.msra.mxu0 0.0
        %209 = vmatprep.subr.mxu0 0.0
        %210 = vmatpush1.msra.mxu0 %v176
        %211 = vmatprep.subr.mxu0 0.0
        %212 = vmatpush1.msra.mxu0 %v175
        %213 = vmatprep.subr.mxu0 0.0
        %214 = vmatpush2.msra.mxu0 0.0
        %215 = vmatprep.subr.mxu0 0.0
        %216 = vmatpush2.msra.mxu0 0.0
        %217 = vmatprep.subr.mxu0 0.0
        %218 = vmatpush2.msra.mxu0 0.0
        %219 = vmatprep.subr.mxu0 0.0
        %220 = vmatpush2.msra.mxu0 0.0
        %221 = vmatprep.subr.mxu0 0.0
        %222 = vmatpush2.msra.mxu0 0.0
        %223 = vmatprep.subr.mxu0 0.0
        %224 = vmatpush2.msra.mxu0 0.0
        %225 = vmatprep.subr.mxu0 0.0
        %226 = vmatpush2.msra.mxu0 0.0
        %227 = vmatprep.subr.mxu0 0.0
        %228 = vmatpush2.msra.mxu0 0.0
        %229 = vmatprep.subr.mxu0 0.0
        %230 = vmatpush2.msra.mxu0 0.0
        %231 = vmatprep.subr.mxu0 0.0
        %232 = vmatpush2.msra.mxu0 0.0
        %233 = vmatprep.subr.mxu0 0.0
        %234 = vmatpush2.msra.mxu0 0.0
        %235 = vmatprep.subr.mxu0 0.0
        %236 = vmatpush2.msra.mxu0 0.0
        %237 = vmatprep.subr.mxu0 0.0
        %238 = vmatpush2.msra.mxu0 0.0
        %239 = vmatprep.subr.mxu0 0.0
        %240 = vmatpush2.msra.mxu0 0.0
        %241 = vmatprep.subr.mxu0 0.0
        %242 = vmatpush2.msra.mxu0 0.0
        %243 = vmatprep.subr.mxu0 0.0
        %244 = vmatpush2.msra.mxu0 0.0
        %245 = vmatprep.mubr.f32.mxu0 0.0
        %246 = vmatmul.mubr.f32.gmra.mxu0 %v179
        %v247 = vpop.f32.mrf.mxu0
        %v248 = vadd.f32 0.0, %v247
        %v249 = vpop.f32.mrf.mxu0
        %250 = vdwg.mxu0
        %251 = vst.msk [vmem:[%s173] sm:$0xff] %vm177, %v248
        %s252 = sand.u32 %s75, 1
        %s253 = scalar_lea.sflag [#allocation4], %s252
        %s254 = sand.u32 %s75, 1
        %s255 = smul.addr %s254, 8
        %s256 = scalar_lea.vmem [#allocation7], %s255
        // Predicated region
        $region37: #{tpu_custom_call.1} parent=27 // pred_check
          %p257 = pneg %p85
        $region38: #{tpu_custom_call.1} parent=27 // pred_check_branch
          %259 = sbr.rel (%p257) target = $region40
        $region39: #{tpu_custom_call.1} parent=27 // pred_region
          %s261 = ssub.s32 128, 128
          %262 = vsyncadd %s253, %s261
          %s263 = smul.addr %s20, 128
          %s264 = scalar_lea.hbm %s2, %s263
          %s266 = sshll.u32 %s256, 4
          %s267 = int_to_ptr.vmem [resolvable:$true] %s266
          %269 = dma.vmem_to_hbm [thread:$0]  %s267, 128, %s264, %s253
        $region40: #{tpu_custom_call.1} parent=27 // pred_fallthru
          _
      $region28: #{tpu_custom_call.1} parent=5 // pred_fallthru
        _
      %p270 = scmp.le.s32.totalorder 2, %s15
      // Predicated region
      $region41: #{tpu_custom_call.1} parent=5 // pred_check
        %p271 = pneg %p270
      $region42: #{tpu_custom_call.1} parent=5 // pred_check_branch
        %273 = sbr.rel (%p271) target = $region44
      $region43: #{tpu_custom_call.1} parent=5 // pred_region
        %s274 = ssub.s32 %s15, 2
        // Predicated region
        $region45: #{tpu_custom_call.1} parent=43 // pred_check
          %p275 = pneg %p91
        $region46: #{tpu_custom_call.1} parent=43 // pred_check_branch
          %277 = sbr.rel (%p275) target = $region48
        $region47: #{tpu_custom_call.1} parent=43 // pred_region
          %s278 = sand.u32 %s76, 1
          %s279 = scalar_lea.sflag [#allocation4], %s278
          %s280 = sand.u32 %s76, 1
          %s281 = smul.addr %s280, 8
          %s282 = scalar_lea.vmem [#allocation7], %s281
          %283 = dma.done %s279, 128
        $region48: #{tpu_custom_call.1} parent=43 // pred_fallthru
          _
      $region44: #{tpu_custom_call.1} parent=5 // pred_fallthru
        _
    $region6: #{tpu_custom_call.1} parent=1 // loop_footer
      %s19 = sadd.s32 1, %s15
    $region7: #{tpu_custom_call.1} parent=1 // loop_footer_branch
      %14 = sbr.rel target = $region3
    $region8: #{tpu_custom_call.1} parent=1 // loop_exit
      _
    %284 = vsyncpa [#allocation3], 1
    %s285 = scalar_lea.sflag [#allocation3], 1
    %286 = vsyncpa %s285, 1
    %287 = vsyncpa [#allocation6], 1
    %s288 = scalar_lea.sflag [#allocation6], 1
    %289 = vsyncpa %s288, 1
    %290 = vsyncpa [#allocation4], 1
    %s291 = scalar_lea.sflag [#allocation4], 1
    %292 = vsyncpa %s291, 1

</llo_original>
